<compile_context>
chip_gen: v6e
topology: v6e:2x2x1
jax: 0.10.0
libtpu: 0.0.40
codegen_flags: <defaults>
</compile_context>

<pallas_src>
import jax
import jax.numpy as jnp
from jax.experimental import pallas as pl
from jax.experimental.pallas import tpu as pltpu


_LANES = 256                      # lane-dense last dim (multiple of 128)
_MAX_TILE_ROWS = 1024             # 1024 x 256 f32 = 1 MiB per tile
_VMEM_LIMIT_BYTES = 32 * 1024 * 1024
_PALLAS_MIN_ELEMS = 64 * 1024     # below this, a fused XLA elementwise op wins


def _cdiv(a, b):
    return (a + b - 1) // b


def _round_up(a, m):
    return _cdiv(a, m) * m


def _plan_layout(total_elems):
    """Pick (rows, tile_rows, n_tiles) for a zero-padded (rows, 256) slab."""
    rows_raw = max(1, _cdiv(total_elems, _LANES))
    n_tiles = max(1, _cdiv(rows_raw, _MAX_TILE_ROWS))
    tile_rows = _round_up(_cdiv(rows_raw, n_tiles), 8)   # (8,128)-aligned row tile
    rows = tile_rows * n_tiles                           # grid divides rows exactly
    return rows, tile_rows, n_tiles


# ---------------------------------------------------------------------------
# Kernels
# ---------------------------------------------------------------------------

def _sum_kernel(x_ref, acc_ref):
    """Pass 1: accumulate the global sum into a resident (1,1) f32 accumulator."""
    @pl.when(pl.program_id(0) == 0)
    def _():
        acc_ref[...] = jnp.zeros_like(acc_ref)
    acc_ref[...] += jnp.sum(x_ref[...], dtype=jnp.float32)


def _add_delta_kernel(delta_ref, x_ref, o_ref):
    """Pass 2: o = x + delta, with delta a (1,1) scalar living in SMEM."""
    o_ref[...] = x_ref[...] + delta_ref[0, 0].astype(x_ref.dtype)


# ---------------------------------------------------------------------------
# Wrappers
# ---------------------------------------------------------------------------

def _cond_model_pallas(x):
    """x: any-shape float array. Returns ((x_new, z_new), z_ones)."""
    orig_shape = x.shape
    total = x.size
    rows, tile_rows, n_tiles = _plan_layout(total)

    flat = x.reshape(-1)
    pad = rows * _LANES - total
    if pad:
        flat = jnp.pad(flat, (0, pad))        # zero padding: neutral for the sum
    slab = flat.reshape(rows, _LANES)

    # Pass 1: global reduction (resident accumulator, reduction axis "arbitrary").
    total_sum = pl.pallas_call(
        _sum_kernel,
        out_shape=jax.ShapeDtypeStruct((1, 1), jnp.float32),
        grid=(n_tiles,),
        in_specs=[pl.BlockSpec((tile_rows, _LANES), lambda i: (i, 0))],
        out_specs=pl.BlockSpec((1, 1), lambda i: (0, 0)),
        compiler_params=pltpu.CompilerParams(
            dimension_semantics=("arbitrary",),
            vmem_limit_bytes=_VMEM_LIMIT_BYTES),
    )(slab)

    # Scalar-folded branch: x+1 if sum>0 else x-1  ==  x + (pred ? +1 : -1).
    pred = total_sum[0, 0] > 0.0
    delta = jnp.where(pred, jnp.float32(1.0), jnp.float32(-1.0)).reshape(1, 1)

    # Pass 2: tiled, pipelined elementwise add; row-tile axis parallel (2 TCs on v7x).
    x_new_slab = pl.pallas_call(
        _add_delta_kernel,
        out_shape=jax.ShapeDtypeStruct((rows, _LANES), x.dtype),
        grid=(n_tiles,),
        in_specs=[
            pl.BlockSpec(memory_space=pltpu.MemorySpace.SMEM),   # delta scalar
            pl.BlockSpec((tile_rows, _LANES), lambda i: (i, 0)), # x tile
        ],
        out_specs=pl.BlockSpec((tile_rows, _LANES), lambda i: (i, 0)),
        compiler_params=pltpu.CompilerParams(
            dimension_semantics=("parallel",),
            vmem_limit_bytes=_VMEM_LIMIT_BYTES),
    )(delta, slab)

    x_new = x_new_slab.reshape(-1)[:total].reshape(orig_shape)

    # z_new = where(pred, 1, 0) and z = ones_like(x) are scalar-determined /
    # constant; built here so XLA fuses them (no kernel HBM writeback).
    z_new = jnp.broadcast_to(pred.astype(x.dtype), orig_shape)
    z_ones = jnp.ones(orig_shape, dtype=x.dtype)
    return (x_new, z_new), z_ones


def _cond_model_xla(x):
    """Fused-XLA path for tiny inputs (launch/step-overhead bound for Pallas)."""
    pred = jnp.sum(x) > 0
    delta = jnp.where(pred, jnp.asarray(1.0, x.dtype), jnp.asarray(-1.0, x.dtype))
    x_new = x + delta
    z_new = jnp.broadcast_to(pred.astype(x.dtype), x.shape)
    return (x_new, z_new), jnp.ones_like(x)


def _cond_model(x):
    # Shape is static at trace time, so this dispatch is free.
    if x.size < _PALLAS_MIN_ELEMS:
        return _cond_model_xla(x)
    return _cond_model_pallas(x)


cond_model = jax.jit(_cond_model)            # size-dispatching entry point
cond_model_pallas = jax.jit(_cond_model_pallas)   # always-Pallas entry point


# ---------------------------------------------------------------------------
# Demo / correctness check
# ---------------------------------------------------------------------------

if __name__ == "__main__":
    key = jax.random.PRNGKey(0)

    def ref_impl(x):
        pred = jnp.sum(x) > 0
        x_new = jnp.where(pred, x + 1.0, x - 1.0)
        z_new = jnp.where(pred, jnp.ones_like(x), jnp.zeros_like(x))
        return (x_new, z_new), jnp.ones_like(x)

    def check(xv, fn):
        (x_new, z_new), z = fn(xv)
        jax.block_until_ready((x_new, z_new, z))
        (rx, rzn), rz = ref_impl(xv)
        assert x_new.shape == xv.shape
        assert jnp.allclose(x_new, rx), "x_new mismatch"
        assert jnp.allclose(z_new, rzn), "z_new mismatch"
        assert jnp.allclose(z, rz), "z mismatch"

    # Primary shape from the module spec; exercise both cond branches.
    x = jax.random.normal(key, (2, 4, 16, 16), dtype=jnp.float32)
    check(x, cond_model_pallas)                    # data-dependent branch
    check(jnp.abs(x) + 0.1, cond_model_pallas)     # forces true branch (sum > 0)
    check(-jnp.abs(x) - 0.1, cond_model_pallas)    # forces false branch (sum < 0)

    # Padding path (total elements not a multiple of 256).
    x_pad = jax.random.normal(jax.random.PRNGKey(1), (2, 4, 16, 15), dtype=jnp.float32)
    check(x_pad, cond_model_pallas)

    # Multi-tile grid path (exercises pipelining across >1 grid step).
    x_big = jax.random.normal(jax.random.PRNGKey(2), (2, 8, 128, 144), dtype=jnp.float32)
    check(x_big, cond_model_pallas)

    # Size-dispatching entry point (tiny input takes the fused-XLA path).
    check(x, cond_model)

    print("KERNEL_OK")
</pallas_src>

<mosaic_0001>
module attributes {stable_mosaic.version = 11 : i64} {
  func.func @_add_delta_kernel(%arg0: i32, %arg1: memref<1x1xf32, #tpu.memory_space<smem>>, %arg2: memref<8x256xf32, #tpu.memory_space<vmem>>, %arg3: memref<8x256xf32, #tpu.memory_space<vmem>>) attributes {dimension_semantics = [#tpu.dimension_semantics<parallel>], iteration_bounds = array<i64: 1>, scalar_prefetch = 0 : i64, scratch_operands = 0 : i64, tpu.core_type = #tpu.core_type<tc>, window_params = [{transform_indices = @transform_0, window_bounds = array<i64: 1, 1>}, {transform_indices = @transform_1, window_bounds = array<i64: 8, 256>}, {transform_indices = @transform_2, window_bounds = array<i64: 8, 256>}]} {
    %c0 = arith.constant 0 : index
    %c0_0 = arith.constant 0 : index
    %0 = vector.load %arg2[%c0, %c0_0] : memref<8x256xf32, #tpu.memory_space<vmem>>, vector<8x256xf32>
    %c0_1 = arith.constant 0 : index
    %c0_2 = arith.constant 0 : index
    %1 = memref.load %arg1[%c0_1, %c0_2] : memref<1x1xf32, #tpu.memory_space<smem>>
    %2 = vector.broadcast %1 : f32 to vector<8x256xf32>
    %3 = arith.addf %0, %2 : vector<8x256xf32>
    %c0_3 = arith.constant 0 : index
    %c0_4 = arith.constant 0 : index
    %4 = vector.load %arg3[%c0_3, %c0_4] : memref<8x256xf32, #tpu.memory_space<vmem>>, vector<8x256xf32>
    tpu.vector_store %arg3[%c0_3, %c0_4], %3 {strides = array<i32>} : memref<8x256xf32, #tpu.memory_space<vmem>>, vector<8x256xf32>,
    return
  }
  func.func @transform_0(%arg0: i32) -> (i32, i32) {
    %c0_i32 = arith.constant 0 : i32
    %c0_i32_0 = arith.constant 0 : i32
    %c0_i32_1 = arith.constant 0 : i32
    return %c0_i32, %c0_i32_0 : i32, i32
  }
  func.func @transform_1(%arg0: i32) -> (i32, i32) {
    %c0_i32 = arith.constant 0 : i32
    %c0_i32_0 = arith.constant 0 : i32
    return %arg0, %c0_i32 : i32, i32
  }
  func.func @transform_2(%arg0: i32) -> (i32, i32) {
    %c0_i32 = arith.constant 0 : i32
    %c0_i32_0 = arith.constant 0 : i32
    return %arg0, %c0_i32 : i32, i32
  }
}

module attributes {stable_mosaic.version = 11 : i64} {
  func.func @_sum_kernel(%arg0: i32, %arg1: memref<8x256xf32, #tpu.memory_space<vmem>>, %arg2: memref<1x1xf32, #tpu.memory_space<vmem>>) attributes {dimension_semantics = [#tpu.dimension_semantics<arbitrary>], iteration_bounds = array<i64: 1>, scalar_prefetch = 0 : i64, scratch_operands = 0 : i64, tpu.core_type = #tpu.core_type<tc>, window_params = [{transform_indices = @transform_0, window_bounds = array<i64: 8, 256>}, {pipeline_mode = #tpu.pipeline_mode<synchronous>, transform_indices = @transform_1, window_bounds = array<i64: 1, 1>}]} {
    %c0_i32 = arith.constant 0 : i32
    %0 = arith.cmpi eq, %arg0, %c0_i32 : i32
    %1 = arith.extui %0 : i1 to i32
    %c0_i32_0 = arith.constant 0 : i32
    %2 = arith.cmpi ne, %1, %c0_i32_0 : i32
    scf.if %2 {
      %cst_6 = arith.constant 0.000000e+00 : f32
      %12 = vector.broadcast %cst_6 : f32 to vector<1x1xf32>
      %c0_7 = arith.constant 0 : index
      %c0_8 = arith.constant 0 : index
      %13 = vector.load %arg2[%c0_7, %c0_8] : memref<1x1xf32, #tpu.memory_space<vmem>>, vector<1x1xf32>
      tpu.vector_store %arg2[%c0_7, %c0_8], %12 {strides = array<i32>} : memref<1x1xf32, #tpu.memory_space<vmem>>, vector<1x1xf32>,
    } else {
    }
    %c0 = arith.constant 0 : index
    %c0_1 = arith.constant 0 : index
    %3 = vector.load %arg2[%c0, %c0_1] : memref<1x1xf32, #tpu.memory_space<vmem>>, vector<1x1xf32>
    %c0_2 = arith.constant 0 : index
    %c0_3 = arith.constant 0 : index
    %4 = vector.load %arg1[%c0_2, %c0_3] : memref<8x256xf32, #tpu.memory_space<vmem>>, vector<8x256xf32>
    %5 = vector.shape_cast %4 : vector<8x256xf32> to vector<1x8x256xf32>
    %cst = arith.constant dense<0.000000e+00> : vector<1xf32>
    %6 = vector.multi_reduction <add>, %5, %cst [1, 2] : vector<1x8x256xf32> to vector<1xf32>
    %7 = vector.shape_cast %6 : vector<1xf32> to vector<1x1x1xf32>
    %8 = vector.extract %7[0, 0, 0] : f32 from vector<1x1x1xf32>
    %9 = vector.broadcast %8 : f32 to vector<1x1xf32>
    %10 = arith.addf %3, %9 : vector<1x1xf32>
    %c0_4 = arith.constant 0 : index
    %c0_5 = arith.constant 0 : index
    %11 = vector.load %arg2[%c0_4, %c0_5] : memref<1x1xf32, #tpu.memory_space<vmem>>, vector<1x1xf32>
    tpu.vector_store %arg2[%c0_4, %c0_5], %10 {strides = array<i32>} : memref<1x1xf32, #tpu.memory_space<vmem>>, vector<1x1xf32>,
    return
  }
  func.func @transform_0(%arg0: i32) -> (i32, i32) {
    %c0_i32 = arith.constant 0 : i32
    %c0_i32_0 = arith.constant 0 : i32
    return %arg0, %c0_i32 : i32, i32
  }
  func.func @transform_1(%arg0: i32) -> (i32, i32) {
    %c0_i32 = arith.constant 0 : i32
    %c0_i32_0 = arith.constant 0 : i32
    %c0_i32_1 = arith.constant 0 : i32
    return %c0_i32, %c0_i32_0 : i32, i32
  }
}

</mosaic_0001>

<llo_original>
// kernel: _cond_model_pallas.3
$region0: #{_cond_model_pallas.3}
  #allocation0 [shape = 'u32[]', space=smem, size = 0x4, offset = 0x4, fixed_abs, tag = 'smem constant byte address 0x4 - core index']
  #allocation1 [shape = 'u32[144,128]{1,0:T(1,128)}', space=vmem, size = 0x12000, scoped, tag = 'internal scratch']
  #allocation2 [shape = 'f32[1,1]{1,0:T(1,128)S(6)}', space=smem, size = 0x200, scoped, tag = 'scoped memory for _cond_model_pallas.3']
  %s0 = inlined_call_operand.<no memory space> [shape: f32[1,1], index: 0, kind: input, shape index: {}]
  %s1 = inlined_call_operand.vmem [shape: f32[8,256], index: 1, kind: input, shape index: {}]
  %s2 = inlined_call_operand.vmem [shape: f32[8,256], index: 2, kind: output, shape index: {}]
  %s3 = sld [smem:[#allocation0]]
  $region18: #{_cond_model_pallas.3} parent=0
    _
  %s5 = ssub.s32 1, %s3
  %s6 = scalar_select 0, %s5, %s3
  %7 = sst [smem:[#allocation2]] %s0
  // Predicated region
  $region2: #{_cond_model_pallas.3} parent=0 // pred_check
    _
  $region3: #{_cond_model_pallas.3} parent=0 // pred_check_branch
    %9 = sbr.rel (0) target = $region5
  $region4: #{_cond_model_pallas.3} parent=0 // pred_region
    _
  $region5: #{_cond_model_pallas.3} parent=0 // pred_fallthru
    _
  // Predicated region
  $region6: #{_cond_model_pallas.3} parent=0 // pred_check
    _
  $region7: #{_cond_model_pallas.3} parent=0 // pred_check_branch
    %11 = sbr.rel (0) target = $region9
  $region8: #{_cond_model_pallas.3} parent=0 // pred_region
    _
  $region9: #{_cond_model_pallas.3} parent=0 // pred_fallthru
    _
  %v12 = vld [vmem:[%s1] sm:$0xff]
  %v13 = vld [vmem:[%s1 + $0x8] sm:$0xff]
  %s14 = sld [smem:[#allocation2]]
  %v15 = vstv %s14
  %v16 = vadd.f32 %v12, %v15
  %v17 = vadd.f32 %v13, %v15
  %18 = vst [vmem:[%s2] sm:$0xff] %v16
  %19 = vst [vmem:[%s2 + $0x8] sm:$0xff] %v17
  // Predicated region
  $region10: #{_cond_model_pallas.3} parent=0 // pred_check
    _
  $region11: #{_cond_model_pallas.3} parent=0 // pred_check_branch
    %21 = sbr.rel (0) target = $region13
  $region12: #{_cond_model_pallas.3} parent=0 // pred_region
    _
  $region13: #{_cond_model_pallas.3} parent=0 // pred_fallthru
    _
  // Predicated region
  $region14: #{_cond_model_pallas.3} parent=0 // pred_check
    _
  $region15: #{_cond_model_pallas.3} parent=0 // pred_check_branch
    %23 = sbr.rel (0) target = $region17
  $region16: #{_cond_model_pallas.3} parent=0 // pred_region
    _
  $region17: #{_cond_model_pallas.3} parent=0 // pred_fallthru
    _

// kernel: _cond_model_pallas.2
$region0: #{_cond_model_pallas.2}
  #allocation0 [shape = 'u32[]', space=smem, size = 0x4, offset = 0x4, fixed_abs, tag = 'smem constant byte address 0x4 - core index']
  #allocation1 [shape = 'u32[144,128]{1,0:T(1,128)}', space=vmem, size = 0x12000, scoped, tag = 'internal scratch']
  %s0 = inlined_call_operand.vmem [shape: f32[8,256], index: 0, kind: input, shape index: {}]
  %s1 = inlined_call_operand.hbm [shape: f32[1,1], index: 1, kind: output, shape index: {}]
  %s2 = sld [smem:[#allocation0]]
  $region18: #{_cond_model_pallas.2} parent=0
    _
  %s4 = ssub.s32 1, %s2
  %s5 = scalar_select 0, %s4, %s2
  $region1: #{_cond_model_pallas.2} parent=0
    #allocation2 [shape = 'u8[512]{0}', space=vmem, size = 0x400, scoped, tag = 'output window, operand 0, single buffered']
    #allocation3 [shape = 's32[1]{0}', space=sflag, size = 0x4, scoped, tag = 'scoped memory for _cond_model_pallas.2']
    %6 = vsyncpa [#allocation3], 0
    // Predicated region
    $region2: #{_cond_model_pallas.2} parent=1 // pred_check
      _
    $region3: #{_cond_model_pallas.2} parent=1 // pred_check_branch
      %8 = sbr.rel (0) target = $region5
    $region4: #{_cond_model_pallas.2} parent=1 // pred_region
      _
    $region5: #{_cond_model_pallas.2} parent=1 // pred_fallthru
      _
    %p9 = scmp.eq.s32.totalorder 0, 0
    // Predicated region
    $region6: #{_cond_model_pallas.2} parent=1 // pred_check
      %p10 = pneg %p9
    $region7: #{_cond_model_pallas.2} parent=1 // pred_check_branch
      %12 = sbr.rel (%p10) target = $region9
    $region8: #{_cond_model_pallas.2} parent=1 // pred_region
      %vm13 = vcmask 0
      %14 = vst.msk [vmem:[#allocation2] sm:$0x1] %vm13, 0.0
    $region9: #{_cond_model_pallas.2} parent=1 // pred_fallthru
      _
    %v15 = vld [vmem:[#allocation2] sm:$0x1]
    %v16 = vld [vmem:[%s0] sm:$0xff]
    %v17 = vld [vmem:[%s0 + $0x8] sm:$0xff]
    %v18 = vadd.f32 %v16, %v17
    %19 = vadd.xlane.f32.xlu0 %v18
    %v20 = vpop.xlane.xlu0 %19
    %v21 = vrot.slane %v20, 4
    %v22 = vadd.f32 %v20, %v21
    %v23 = vrot.slane %v22, 2
    %v24 = vadd.f32 %v22, %v23
    %v25 = vrot.slane %v24, 1
    %v26 = vadd.f32 %v24, %v25
    %s27 = vtos %v26
    %v28 = vstv %s27
    %v29 = vadd.f32 %v15, %v28
    %vm30 = vcmask 0
    %31 = vst.msk [vmem:[#allocation2] sm:$0x1] %vm30, %v29
    // Predicated region
    $region10: #{_cond_model_pallas.2} parent=1 // pred_check
      _
    $region11: #{_cond_model_pallas.2} parent=1 // pred_check_branch
      %33 = sbr.rel (0) target = $region13
    $region12: #{_cond_model_pallas.2} parent=1 // pred_region
      %s35 = ssub.s32 16, 16
      %36 = vsyncadd [#allocation3], %s35
      %s38 = sshll.u32 [#allocation2], 4
      %s39 = int_to_ptr.vmem [resolvable:$true] %s38
      %41 = dma.vmem_to_hbm [thread:$0]  %s39, 16, %s1, [#allocation3]
    $region13: #{_cond_model_pallas.2} parent=1 // pred_fallthru
      _
    // Predicated region
    $region14: #{_cond_model_pallas.2} parent=1 // pred_check
      _
    $region15: #{_cond_model_pallas.2} parent=1 // pred_check_branch
      %43 = sbr.rel (0) target = $region17
    $region16: #{_cond_model_pallas.2} parent=1 // pred_region
      %44 = dma.done [#allocation3], 16
    $region17: #{_cond_model_pallas.2} parent=1 // pred_fallthru
      _
    %45 = vsyncpa [#allocation3], 1

</llo_original>
